<compile_context>
chip_gen: v6e
topology: v6e:2x2x1
jax: 0.10.0
libtpu: 0.0.40
codegen_flags: <defaults>
</compile_context>

<pallas_src>
import functools

import jax
import jax.numpy as jnp
from jax import lax
from jax.experimental import pallas as pl
from jax.experimental.pallas import tpu as pltpu


# ----------------------------------------------------------------------------
# Tile selection / compiler params
# ----------------------------------------------------------------------------
def _choose_tiles(ab, cd, itemsize):
    """Pick (row tile TM, contraction tile TK) for the gram matmul."""
    # Row tile: split gram rows (>=128, MXU-friendly) so v7x megacore can
    # shard the "parallel" axis; small channel counts keep the full extent
    # (block == full dim satisfies the (8,128) layout rule).
    if ab >= 512 and ab % 256 == 0:
        tm = 256
    elif ab >= 256 and ab % 128 == 0:
        tm = 128
    else:
        tm = ab

    # K tile: largest 256-multiple (v6e/v7x MXU width, also 128-multiple for
    # v5e) dividing cd whose double-buffered feature tiles stay well under the
    # smallest scoped-VMEM budget across generations.
    budget = 8 * 1024 * 1024
    divisors = [c for c in (4096, 2048, 1024, 512, 256, 128) if cd % c == 0]
    tk = None
    for cand in divisors:
        if 2 * (tm + ab) * cand * itemsize <= budget:
            tk = cand
            break
    if tk is None:
        tk = divisors[-1] if divisors else cd  # fall back to full extent
    return tm, tk


def _compiler_params(tm, ab, tk, itemsize):
    # double-buffered inputs + double-buffered output/target + accumulator
    need = 2 * (tm + ab) * tk * itemsize + 5 * tm * ab * 4
    vmem_limit = int(min(max(2 * need, 32 * 1024 * 1024), 48 * 1024 * 1024))
    return pltpu.CompilerParams(
        dimension_semantics=("parallel", "arbitrary"),
        vmem_limit_bytes=vmem_limit,
    )


# ----------------------------------------------------------------------------
# Kernel 1: gram matrix  G = (F @ F^T) / (a*b*c*d), K-tiled with f32 accumulator
# ----------------------------------------------------------------------------
def _gram_kernel_square(f_ref, g_ref, acc_ref, *, inv_n):
    # tm == ab: one row tile, single feature input (no duplicate DMA).
    k = pl.program_id(1)

    @pl.when(k == 0)
    def _():
        acc_ref[...] = jnp.zeros_like(acc_ref)

    f = f_ref[...]
    acc_ref[...] += lax.dot_general(
        f, f, (((1,), (1,)), ((), ())), preferred_element_type=jnp.float32)

    @pl.when(k == pl.num_programs(1) - 1)
    def _():
        g_ref[...] = (acc_ref[...] * inv_n).astype(g_ref.dtype)


def _gram_kernel_tiled(frow_ref, fall_ref, g_ref, acc_ref, *, inv_n):
    # row-parallel variant: rows tile (tm, tk) x all rows (ab, tk) -> (tm, ab)
    k = pl.program_id(1)

    @pl.when(k == 0)
    def _():
        acc_ref[...] = jnp.zeros_like(acc_ref)

    acc_ref[...] += lax.dot_general(
        frow_ref[...], fall_ref[...], (((1,), (1,)), ((), ())),
        preferred_element_type=jnp.float32)

    @pl.when(k == pl.num_programs(1) - 1)
    def _():
        g_ref[...] = (acc_ref[...] * inv_n).astype(g_ref.dtype)


def gram_matrix(x, *, compute_dtype=jnp.bfloat16):
    """x: (a, b, c, d) NCHW -> (a*b, a*b) f32 gram matrix (torch semantics)."""
    a, b, c, d = x.shape
    ab, cd = a * b, c * d
    features = x.reshape(ab, cd).astype(compute_dtype)   # glue (plain JAX)
    itemsize = jnp.dtype(compute_dtype).itemsize
    tm, tk = _choose_tiles(ab, cd, itemsize)
    nrt, nk = ab // tm, cd // tk
    inv_n = 1.0 / float(a * b * c * d)

    cost = pl.CostEstimate(
        flops=2 * ab * ab * cd,
        transcendentals=0,
        bytes_accessed=(1 + nrt) * ab * cd * itemsize + ab * ab * 4,
    )
    out_shape = jax.ShapeDtypeStruct((ab, ab), jnp.float32)
    out_spec = pl.BlockSpec((tm, ab), lambda i, k: (i, 0))
    scratch = [pltpu.VMEM((tm, ab), jnp.float32)]
    params = _compiler_params(tm, ab, tk, itemsize)

    if tm == ab:
        return pl.pallas_call(
            functools.partial(_gram_kernel_square, inv_n=inv_n),
            out_shape=out_shape,
            grid_spec=pltpu.PrefetchScalarGridSpec(
                num_scalar_prefetch=0,
                grid=(nrt, nk),
                in_specs=[pl.BlockSpec((ab, tk), lambda i, k: (0, k))],
                out_specs=out_spec,
                scratch_shapes=scratch,
            ),
            compiler_params=params,
            cost_estimate=cost,
        )(features)

    return pl.pallas_call(
        functools.partial(_gram_kernel_tiled, inv_n=inv_n),
        out_shape=out_shape,
        grid_spec=pltpu.PrefetchScalarGridSpec(
            num_scalar_prefetch=0,
            grid=(nrt, nk),
            in_specs=[
                pl.BlockSpec((tm, tk), lambda i, k: (i, k)),   # row tile
                pl.BlockSpec((ab, tk), lambda i, k: (0, k)),   # all rows
            ],
            out_specs=out_spec,
            scratch_shapes=scratch,
        ),
        compiler_params=params,
        cost_estimate=cost,
    )(features, features)


# ----------------------------------------------------------------------------
# Kernel 2 (fused forward): K-tiled gram of input + MSE against target gram
# ----------------------------------------------------------------------------
def _style_loss_kernel_square(f_ref, tgt_ref, loss_ref, acc_ref, *, inv_n):
    k = pl.program_id(1)

    @pl.when(k == 0)
    def _():
        acc_ref[...] = jnp.zeros_like(acc_ref)

    f = f_ref[...]
    acc_ref[...] += lax.dot_general(
        f, f, (((1,), (1,)), ((), ())), preferred_element_type=jnp.float32)

    @pl.when(k == pl.num_programs(1) - 1)
    def _():
        diff = acc_ref[...] * inv_n - tgt_ref[...]
        partial = jnp.sum(diff * diff)                    # f32
        loss_ref[...] = jnp.broadcast_to(partial, loss_ref.shape)


def _style_loss_kernel_tiled(frow_ref, fall_ref, tgt_ref, loss_ref, acc_ref,
                             *, inv_n):
    k = pl.program_id(1)

    @pl.when(k == 0)
    def _():
        acc_ref[...] = jnp.zeros_like(acc_ref)

    acc_ref[...] += lax.dot_general(
        frow_ref[...], fall_ref[...], (((1,), (1,)), ((), ())),
        preferred_element_type=jnp.float32)

    @pl.when(k == pl.num_programs(1) - 1)
    def _():
        diff = acc_ref[...] * inv_n - tgt_ref[...]
        partial = jnp.sum(diff * diff)                    # f32
        loss_ref[...] = jnp.broadcast_to(partial, loss_ref.shape)


class StyleLoss:
    """JAX/Pallas port of the PyTorch StyleLoss module (forward pass)."""

    def __init__(self, target, *, compute_dtype=jnp.bfloat16):
        # target: (a, b, c, d) NCHW
        self.compute_dtype = compute_dtype
        self.target = gram_matrix(target, compute_dtype=compute_dtype)
        self.loss = None

    def __call__(self, x):
        a, b, c, d = x.shape
        ab, cd = a * b, c * d
        assert self.target.shape == (ab, ab), "target/input shape mismatch"
        features = x.reshape(ab, cd).astype(self.compute_dtype)
        itemsize = jnp.dtype(self.compute_dtype).itemsize
        tm, tk = _choose_tiles(ab, cd, itemsize)
        nrt, nk = ab // tm, cd // tk
        inv_n = 1.0 / float(a * b * c * d)
        inv_m = 1.0 / float(ab * ab)

        cost = pl.CostEstimate(
            flops=2 * ab * ab * cd + 3 * ab * ab,
            transcendentals=0,
            bytes_accessed=(1 + nrt) * ab * cd * itemsize + 2 * ab * ab * 4,
        )
        # Lane-friendly partial-loss output: one (8,128) padded f32 slab per
        # row tile; reduced to a scalar below (tiny JAX epilogue).
        out_shape = jax.ShapeDtypeStruct((nrt, 8, 128), jnp.float32)
        out_spec = pl.BlockSpec((1, 8, 128), lambda i, k: (i, 0, 0))
        tgt_spec = pl.BlockSpec((tm, ab), lambda i, k: (i, 0))
        scratch = [pltpu.VMEM((tm, ab), jnp.float32)]
        params = _compiler_params(tm, ab, tk, itemsize)

        if tm == ab:
            partials = pl.pallas_call(
                functools.partial(_style_loss_kernel_square, inv_n=inv_n),
                out_shape=out_shape,
                grid_spec=pltpu.PrefetchScalarGridSpec(
                    num_scalar_prefetch=0,
                    grid=(nrt, nk),
                    in_specs=[pl.BlockSpec((ab, tk), lambda i, k: (0, k)),
                              tgt_spec],
                    out_specs=out_spec,
                    scratch_shapes=scratch,
                ),
                compiler_params=params,
                cost_estimate=cost,
            )(features, self.target)
        else:
            partials = pl.pallas_call(
                functools.partial(_style_loss_kernel_tiled, inv_n=inv_n),
                out_shape=out_shape,
                grid_spec=pltpu.PrefetchScalarGridSpec(
                    num_scalar_prefetch=0,
                    grid=(nrt, nk),
                    in_specs=[
                        pl.BlockSpec((tm, tk), lambda i, k: (i, k)),
                        pl.BlockSpec((ab, tk), lambda i, k: (0, k)),
                        tgt_spec,
                    ],
                    out_specs=out_spec,
                    scratch_shapes=scratch,
                ),
                compiler_params=params,
                cost_estimate=cost,
            )(features, features, self.target)

        # NOTE: under jax.jit, self.loss is a traced value (same caveat as the
        # PyTorch module storing a tensor attribute).
        self.loss = jnp.sum(partials[:, 0, 0]) * inv_m
        # Like the PyTorch module, forward returns its input unchanged.
        return x


# ----------------------------------------------------------------------------
# Pure-JAX references for correctness checks
# ----------------------------------------------------------------------------
def _ref_gram(x, dtype):
    a, b, c, d = x.shape
    f = x.reshape(a * b, c * d).astype(dtype)
    g = lax.dot_general(f, f, (((1,), (1,)), ((), ())),
                        preferred_element_type=jnp.float32)
    return g / float(a * b * c * d)


def _ref_loss(x, target, dtype):
    return jnp.mean((_ref_gram(x, dtype) - _ref_gram(target, dtype)) ** 2)


if __name__ == "__main__":
    key = jax.random.PRNGKey(0)
    k1, k2 = jax.random.split(key)

    # Small NCHW shapes consistent with the module's forward.
    a, b, c, d = 2, 4, 16, 16
    target = jax.random.normal(k1, (a, b, c, d), dtype=jnp.float32)
    x = jax.random.normal(k2, (a, b, c, d), dtype=jnp.float32)

    module = StyleLoss(target)
    out = module(x)
    loss = module.loss
    jax.block_until_ready(out)
    jax.block_until_ready(loss)

    # Forward returns its input unchanged.
    assert out.shape == x.shape
    assert jnp.allclose(out, x)

    # Tight check against a reference using the same bf16 MXU inputs with
    # f32 accumulation (same numerics as the kernel).
    ref_bf16 = _ref_loss(x, target, jnp.bfloat16)
    assert jnp.allclose(loss, ref_bf16, rtol=1e-4, atol=1e-7), (loss, ref_bf16)

    # Loose sanity check against the pure-f32 reference (bf16 input rounding).
    ref_f32 = _ref_loss(x, target, jnp.float32)
    assert jnp.allclose(loss, ref_f32, rtol=1e-1, atol=1e-6), (loss, ref_f32)

    # gram_matrix kernel itself.
    g = gram_matrix(x)
    jax.block_until_ready(g)
    assert jnp.allclose(g, _ref_gram(x, jnp.bfloat16), rtol=1e-4, atol=1e-6)

    print("KERNEL_OK")
</pallas_src>

<mosaic_0001>
module attributes {stable_mosaic.version = 11 : i64} {
  func.func @_gram_kernel_square(%arg0: i32, %arg1: i32, %arg2: memref<8x256xbf16, #tpu.memory_space<vmem>>, %arg3: memref<8x8xf32, #tpu.memory_space<vmem>>, %arg4: memref<8x8xf32, #tpu.memory_space<vmem>>) attributes {dimension_semantics = [#tpu.dimension_semantics<parallel>, #tpu.dimension_semantics<arbitrary>], iteration_bounds = array<i64: 1, 1>, scalar_prefetch = 0 : i64, scratch_operands = 1 : i64, tpu.core_type = #tpu.core_type<tc>, window_params = [{transform_indices = @transform_0, window_bounds = array<i64: 8, 256>}, {transform_indices = @transform_1, window_bounds = array<i64: 8, 8>}]} {
    %c0_i32 = arith.constant 0 : i32
    %0 = arith.cmpi eq, %arg1, %c0_i32 : i32
    %1 = arith.extui %0 : i1 to i32
    %c0_i32_0 = arith.constant 0 : i32
    %2 = arith.cmpi ne, %1, %c0_i32_0 : i32
    scf.if %2 {
      %cst_8 = arith.constant 0.000000e+00 : f32
      %11 = vector.broadcast %cst_8 : f32 to vector<8x8xf32>
      %c0_9 = arith.constant 0 : index
      %c0_10 = arith.constant 0 : index
      %12 = vector.load %arg4[%c0_9, %c0_10] : memref<8x8xf32, #tpu.memory_space<vmem>>, vector<8x8xf32>
      tpu.vector_store %arg4[%c0_9, %c0_10], %11 {strides = array<i32>} : memref<8x8xf32, #tpu.memory_space<vmem>>, vector<8x8xf32>,
    } else {
    }
    %c0 = arith.constant 0 : index
    %c0_1 = arith.constant 0 : index
    %3 = vector.load %arg2[%c0, %c0_1] : memref<8x256xbf16, #tpu.memory_space<vmem>>, vector<8x256xbf16>
    %c0_2 = arith.constant 0 : index
    %c0_3 = arith.constant 0 : index
    %4 = vector.load %arg4[%c0_2, %c0_3] : memref<8x8xf32, #tpu.memory_space<vmem>>, vector<8x8xf32>
    %cst = arith.constant dense<0.000000e+00> : vector<8x8xf32>
    %5 = tpu.matmul %3, %3, %cst {dimension_numbers = #tpu.dot_dimension_numbers<[1], [1], [0], [0], [0, 0, 1, 0], [], []>} : vector<8x256xbf16>, vector<8x256xbf16>, vector<8x8xf32> -> vector<8x8xf32>
    %6 = arith.addf %4, %5 : vector<8x8xf32>
    %c0_4 = arith.constant 0 : index
    %c0_5 = arith.constant 0 : index
    %7 = vector.load %arg4[%c0_4, %c0_5] : memref<8x8xf32, #tpu.memory_space<vmem>>, vector<8x8xf32>
    tpu.vector_store %arg4[%c0_4, %c0_5], %6 {strides = array<i32>} : memref<8x8xf32, #tpu.memory_space<vmem>>, vector<8x8xf32>,
    %c0_i32_6 = arith.constant 0 : i32
    %8 = arith.cmpi eq, %arg1, %c0_i32_6 : i32
    %9 = arith.extui %8 : i1 to i32
    %c0_i32_7 = arith.constant 0 : i32
    %10 = arith.cmpi ne, %9, %c0_i32_7 : i32
    scf.if %10 {
      %c0_8 = arith.constant 0 : index
      %c0_9 = arith.constant 0 : index
      %11 = vector.load %arg4[%c0_8, %c0_9] : memref<8x8xf32, #tpu.memory_space<vmem>>, vector<8x8xf32>
      %cst_10 = arith.constant 4.8828125E-4 : f32
      %12 = vector.broadcast %cst_10 : f32 to vector<8x8xf32>
      %13 = arith.mulf %11, %12 : vector<8x8xf32>
      %c0_11 = arith.constant 0 : index
      %c0_12 = arith.constant 0 : index
      %14 = vector.load %arg3[%c0_11, %c0_12] : memref<8x8xf32, #tpu.memory_space<vmem>>, vector<8x8xf32>
      tpu.vector_store %arg3[%c0_11, %c0_12], %13 {strides = array<i32>} : memref<8x8xf32, #tpu.memory_space<vmem>>, vector<8x8xf32>,
    } else {
    }
    return
  }
  func.func @transform_0(%arg0: i32, %arg1: i32) -> (i32, i32) {
    %c0_i32 = arith.constant 0 : i32
    %c0_i32_0 = arith.constant 0 : i32
    return %c0_i32, %arg1 : i32, i32
  }
  func.func @transform_1(%arg0: i32, %arg1: i32) -> (i32, i32) {
    %c0_i32 = arith.constant 0 : i32
    %c0_i32_0 = arith.constant 0 : i32
    return %arg0, %c0_i32 : i32, i32
  }
}

</mosaic_0001>

<llo_original>
// kernel: tpu_custom_call.1
$region0: #{tpu_custom_call.1}
  #allocation0 [shape = 'u32[]', space=smem, size = 0x4, offset = 0x4, fixed_abs, tag = 'smem constant byte address 0x4 - core index']
  #allocation1 [shape = 'u32[144,128]{1,0:T(1,128)}', space=vmem, size = 0x12000, scoped, tag = 'internal scratch']
  #allocation2 [shape = 'f32[8,8]{1,0:T(8,128)}', space=vmem, size = 0x1000, scoped, tag = 'scratch operand']
  %s0 = inlined_call_operand.hbm [shape: bf16[8,256], index: 0, kind: input, shape index: {}]
  %s1 = inlined_call_operand.hbm [shape: f32[8,8], index: 1, kind: output, shape index: {}]
  %s2 = sld [smem:[#allocation0]]
  $region26: #{tpu_custom_call.1} parent=0
    _
  %s4 = ssub.s32 1, %s2
  %s5 = scalar_select 0, %s4, %s2
  $region1: #{tpu_custom_call.1} parent=0
    #allocation3 [shape = 'u8[4096]{0}', space=vmem, size = 0x1000, scoped, tag = 'input window, operand 0, single buffered']
    #allocation4 [shape = 's32[1]{0}', space=sflag, size = 0x4, scoped, tag = 'scoped memory for tpu_custom_call.1']
    #allocation5 [shape = 's32[1]{0}', space=sflag, size = 0x4, scoped, tag = 'scoped memory for tpu_custom_call.1']
    #allocation6 [shape = 'u8[4096]{0}', space=vmem, size = 0x1000, scoped, tag = 'output window, operand 0, single buffered']
    %6 = vsyncpa [#allocation4], 0
    %7 = vsyncpa [#allocation5], 0
    // Predicated region
    $region2: #{tpu_custom_call.1} parent=1 // pred_check
      _
    $region3: #{tpu_custom_call.1} parent=1 // pred_check_branch
      %9 = sbr.rel (0) target = $region5
    $region4: #{tpu_custom_call.1} parent=1 // pred_region
      %s11 = ssub.s32 128, 128
      %12 = vsyncadd [#allocation4], %s11
      %s14 = sshll.u32 [#allocation3], 4
      %s15 = int_to_ptr.vmem [resolvable:$true] %s14
      %17 = dma.hbm_to_vmem [thread:$0]  %s0, 128, %s15, [#allocation4]
    $region5: #{tpu_custom_call.1} parent=1 // pred_fallthru
      _
    // Predicated region
    $region6: #{tpu_custom_call.1} parent=1 // pred_check
      _
    $region7: #{tpu_custom_call.1} parent=1 // pred_check_branch
      %19 = sbr.rel (0) target = $region9
    $region8: #{tpu_custom_call.1} parent=1 // pred_region
      %20 = dma.done [#allocation4], 128
    $region9: #{tpu_custom_call.1} parent=1 // pred_fallthru
      _
    %p22 = scmp.eq.s32.totalorder 0, 0
    // Predicated region
    $region10: #{tpu_custom_call.1} parent=1 // pred_check
      %p23 = pneg %p22
    $region11: #{tpu_custom_call.1} parent=1 // pred_check_branch
      %25 = sbr.rel (%p23) target = $region13
    $region12: #{tpu_custom_call.1} parent=1 // pred_region
      %vm26 = vcmask 64512
      %27 = vst.msk [vmem:[#allocation2] sm:$0xff] %vm26, 0.0
    $region13: #{tpu_custom_call.1} parent=1 // pred_fallthru
      _
    %v28 = vld [vmem:[#allocation3] sm:$0xff]
    %v29 = vld [vmem:[#allocation2] sm:$0xff]
    %v31 = vunpack.c.l.b16 %v28
    %v32 = vunpack.c.h.b16 %v28
    %v33 = vpack.c.b16 %v31, %v31
    %v34 = vpack.c.b16 %v32, %v32
    %37 = vmatprep.subr.bf16.mxu0 0
    %38 = vmatpush1.bf16.xpose.msra.mxu0 0
    %39 = vmatprep.subr.bf16.mxu0 0
    %40 = vmatpush1.bf16.xpose.msra.mxu0 0
    %41 = vmatprep.subr.bf16.mxu0 0
    %42 = vmatpush1.bf16.xpose.msra.mxu0 0
    %43 = vmatprep.subr.bf16.mxu0 0
    %44 = vmatpush1.bf16.xpose.msra.mxu0 0
    %45 = vmatprep.subr.bf16.mxu0 0
    %46 = vmatpush1.bf16.xpose.msra.mxu0 0
    %47 = vmatprep.subr.bf16.mxu0 0
    %48 = vmatpush1.bf16.xpose.msra.mxu0 0
    %49 = vmatprep.subr.bf16.mxu0 0
    %50 = vmatpush1.bf16.xpose.msra.mxu0 0
    %51 = vmatprep.subr.bf16.mxu0 %v34
    %52 = vmatpush1.bf16.xpose.msra.mxu0 %v33
    %53 = vmatprep.subr.bf16.mxu0 0
    %54 = vmatpush2.bf16.xpose.msra.mxu0 0
    %55 = vmatprep.subr.bf16.mxu0 0
    %56 = vmatpush2.bf16.xpose.msra.mxu0 0
    %57 = vmatprep.subr.bf16.mxu0 0
    %58 = vmatpush2.bf16.xpose.msra.mxu0 0
    %59 = vmatprep.subr.bf16.mxu0 0
    %60 = vmatpush2.bf16.xpose.msra.mxu0 0
    %61 = vmatprep.subr.bf16.mxu0 0
    %62 = vmatpush2.bf16.xpose.msra.mxu0 0
    %63 = vmatprep.subr.bf16.mxu0 0
    %64 = vmatpush2.bf16.xpose.msra.mxu0 0
    %65 = vmatprep.subr.bf16.mxu0 0
    %66 = vmatpush2.bf16.xpose.msra.mxu0 0
    %67 = vmatprep.subr.bf16.mxu0 0
    %68 = vmatpush2.bf16.xpose.msra.mxu0 0
    %69 = vmatprep.mubr.bf16.mxu0 %v34
    %70 = vmatmul.mubr.bf16.gmra.mxu0 %v33
    %v71 = vpop.f32.mrf.mxu0
    %v72 = vadd.f32 0.0, %v71
    %v73 = vpop.f32.mrf.mxu0
    %v74 = vpop.f32.mrf.mxu0
    %v75 = vpop.f32.mrf.mxu0
    %76 = vdwg.mxu0
    %v77 = vadd.f32 %v29, %v72
    %vm78 = vcmask 64512
    %79 = vst.msk [vmem:[#allocation2] sm:$0xff] %vm78, %v77
    // Predicated region
    $region14: #{tpu_custom_call.1} parent=1 // pred_check
      %p80 = pneg %p22
    $region15: #{tpu_custom_call.1} parent=1 // pred_check_branch
      %82 = sbr.rel (%p80) target = $region17
    $region16: #{tpu_custom_call.1} parent=1 // pred_region
      %v83 = vld [vmem:[#allocation2] sm:$0xff]
      %v84 = vmul.f32 %v83, 0.00048828125
      %85 = vst.msk [vmem:[#allocation6] sm:$0xff] %vm78, %v84
    $region17: #{tpu_custom_call.1} parent=1 // pred_fallthru
      _
    // Predicated region
    $region18: #{tpu_custom_call.1} parent=1 // pred_check
      _
    $region19: #{tpu_custom_call.1} parent=1 // pred_check_branch
      %87 = sbr.rel (0) target = $region21
    $region20: #{tpu_custom_call.1} parent=1 // pred_region
      %s89 = ssub.s32 128, 128
      %90 = vsyncadd [#allocation5], %s89
      %s92 = sshll.u32 [#allocation6], 4
      %s93 = int_to_ptr.vmem [resolvable:$true] %s92
      %95 = dma.vmem_to_hbm [thread:$0]  %s93, 128, %s1, [#allocation5]
    $region21: #{tpu_custom_call.1} parent=1 // pred_fallthru
      _
    // Predicated region
    $region22: #{tpu_custom_call.1} parent=1 // pred_check
      _
    $region23: #{tpu_custom_call.1} parent=1 // pred_check_branch
      %97 = sbr.rel (0) target = $region25
    $region24: #{tpu_custom_call.1} parent=1 // pred_region
      %98 = dma.done [#allocation5], 128
    $region25: #{tpu_custom_call.1} parent=1 // pred_fallthru
      _
    %99 = vsyncpa [#allocation4], 1
    %100 = vsyncpa [#allocation5], 1

</llo_original>
